<compile_context>
chip_gen: v7x
topology: tpu7x:2x2x1
jax: 0.10.0
libtpu: 0.0.40
codegen_flags: <defaults>
</compile_context>

<pallas_src>
import numpy as np
import jax
import jax.numpy as jnp
from jax.experimental import pallas as pl
from jax.experimental.pallas import tpu as pltpu


def _round_up(x, m):
    return ((x + m - 1) // m) * m


def _embed_kernel(x_ref, xcat_ref, s_ref, w_ref, o_ref, op_ref):
    """One batch tile.

    x_ref:    (TB, n_in_pad)   f32  raw input row tile (zero-padded lanes)
    xcat_ref: (TB, n_cat_pad)  i32  categorical codes, pre-offset into [0, total_cat)
    s_ref:    (n_cat_pad, Kc_pad) f32 lane-ownership selector (resident)
    w_ref:    (K_pad, P_pad)   f32  stacked [input scatter ; block-diag embeddings] (resident)
    o_ref:    (TB, P_pad)      f32  output tile
    op_ref:   (TB, K_pad)      f32  scratch: fused matmul operand
    """
    tb = x_ref.shape[0]
    n_in_pad = x_ref.shape[1]
    kc_pad = s_ref.shape[1]

    # code-per-lane via a tiny MXU matmul, then one VPU compare -> multi-hot.
    codes = xcat_ref[...].astype(jnp.float32)                        # (TB, n_cat_pad)
    code_per_lane = jnp.dot(codes, s_ref[...],
                            preferred_element_type=jnp.float32)      # (TB, Kc_pad)
    lane = jax.lax.broadcasted_iota(jnp.int32, (tb, kc_pad), 1)
    multihot = (lane == code_per_lane.astype(jnp.int32)).astype(jnp.float32)

    # fused operand: [raw input | multihot]; both slices are 128-lane aligned.
    op_ref[:, :n_in_pad] = x_ref[...]
    op_ref[:, n_in_pad:] = multihot

    # single MXU matmul against the VMEM-resident stacked weight matrix.
    o_ref[...] = jnp.dot(op_ref[...], w_ref[...],
                         preferred_element_type=jnp.float32)


class TabularDataEmbeddingGeneratorPallas:
    """JAX/Pallas port of the PyTorch TabularDataEmbeddingGenerator."""

    def __init__(self, input_dim, cat_dims, cat_idxs, cat_emb_dims, group_matrix,
                 key, batch_tile=256):
        self.input_dim = int(input_dim)
        self.batch_tile = int(batch_tile)

        if cat_dims == [] and cat_idxs == []:
            self.skip_embedding = True
            self.post_embed_dim = int(input_dim)
            self.embedding_group_matrix = np.asarray(group_matrix)
            return
        self.skip_embedding = False

        self.cat_dims = list(cat_dims)
        self.cat_idxs = list(cat_idxs)
        self.cat_emb_dims = list(cat_emb_dims)
        self.post_embed_dim = int(input_dim + int(np.sum(cat_emb_dims)) - len(cat_emb_dims))

        cont = np.ones(input_dim, dtype=bool)
        cont[np.asarray(cat_idxs)] = False
        self.continuous_idx = cont
        self.cont_idxs = np.nonzero(cont)[0]
        self.n_cont = int(cont.sum())
        self.n_cat = len(cat_idxs)
        self.total_cat = int(np.sum(cat_dims))

        # Embedding tables, init like torch.nn.Embedding default: N(0, 1)
        keys = jax.random.split(key, self.n_cat)
        self.emb_tables = [
            jax.random.normal(keys[i], (cat_dims[i], cat_emb_dims[i]), dtype=jnp.float32)
            for i in range(self.n_cat)
        ]

        # Output-column start of every original feature, in forward() order.
        out_col = np.zeros(input_dim, dtype=np.int32)
        cat_order = {idx: k for k, idx in enumerate(cat_idxs)}
        p = 0
        for feat in range(input_dim):
            out_col[feat] = p
            p += 1 if cont[feat] else cat_emb_dims[cat_order[feat]]
        P = self.post_embed_dim
        assert p == P

        # Padded geometry: lane-dense output + 128-aligned operand blocks.
        self.P_pad = _round_up(P, 128)
        self.n_in_pad = _round_up(max(self.input_dim, 1), 128)
        self.Kc_pad = _round_up(self.total_cat, 128)
        self.K_pad = self.n_in_pad + self.Kc_pad
        self.n_cat_pad = _round_up(self.n_cat, 8)

        # Per-feature row offsets into the concatenated category axis.
        offsets = np.cumsum([0] + list(cat_dims[:-1])).astype(np.int32)
        self.offsets = jnp.asarray(offsets)
        self.cat_dims_arr = jnp.asarray(np.asarray(cat_dims, dtype=np.int32))

        # Lane-ownership selector: S[f, lane] = 1 iff lane lies in feature f's block.
        sel = np.zeros((self.n_cat_pad, self.Kc_pad), dtype=np.float32)
        for f in range(self.n_cat):
            sel[f, offsets[f]:offsets[f] + cat_dims[f]] = 1.0
        self.selector = jnp.asarray(sel)

        # Stacked weight matrix: [input scatter (zero rows for categorical cols) ;
        #                         block-diagonal, column-permuted embeddings]
        w_all = np.zeros((self.K_pad, self.P_pad), dtype=np.float32)
        for feat in range(input_dim):
            if cont[feat]:
                w_all[feat, out_col[feat]] = 1.0
        for f, feat in enumerate(cat_idxs):
            d, e = cat_dims[f], cat_emb_dims[f]
            r = self.n_in_pad + offsets[f]
            c = out_col[feat]
            w_all[r:r + d, c:c + e] = np.asarray(self.emb_tables[f])
        self.w_all = jnp.asarray(w_all)

        # embedding_group_matrix (init-time bookkeeping only, mirrors torch __init__).
        gm = np.asarray(group_matrix, dtype=np.float32)
        n_groups = gm.shape[0]
        egm = np.empty((n_groups, P), dtype=np.float32)
        for g in range(n_groups):
            pe = 0
            cc = 0
            for feat in range(input_dim):
                if cont[feat]:
                    egm[g, pe] = gm[g, feat]
                    pe += 1
                else:
                    ne = cat_emb_dims[cc]
                    egm[g, pe:pe + ne] = gm[g, feat] / ne
                    pe += ne
                    cc += 1
        self.embedding_group_matrix = egm

    # ---- VMEM budget (sized for v7x's 64 MiB physical VMEM) -------------
    def _vmem_bytes(self, tb):
        f32 = 4
        resident = (self.K_pad * self.P_pad + self.n_cat_pad * self.Kc_pad) * f32
        streamed = 2 * tb * (self.n_in_pad + self.n_cat_pad + self.P_pad) * f32  # dbl-buffered I/O
        scratch = tb * self.K_pad * f32
        temps = 3 * tb * self.Kc_pad * f32
        return resident + streamed + scratch + temps

    def __call__(self, x):
        if self.skip_embedding:
            return x
        B = x.shape[0]

        # Batch tile: large enough to amortize per-step overhead, auto-shrunk
        # to stay under a 48 MiB working-set budget (v7x-safe).
        tb = min(self.batch_tile, _round_up(B, 8))
        while tb > 8 and self._vmem_bytes(tb) > 48 * 1024 * 1024:
            tb //= 2
        tb = max(tb, 8)
        b_pad = _round_up(B, tb)

        xf = x.astype(jnp.float32)
        x_in = jnp.pad(xf, ((0, b_pad - B), (0, self.n_in_pad - self.input_dim)))

        # Categorical codes: clip to valid range (avoid silent aliasing across
        # feature blocks), then offset into the global [0, total_cat) axis.
        codes = x_in[:, np.asarray(self.cat_idxs)].astype(jnp.int32)
        codes = jnp.clip(codes, 0, self.cat_dims_arr[None, :] - 1)
        x_cat = jnp.zeros((b_pad, self.n_cat_pad), jnp.int32)
        x_cat = x_cat.at[:, : self.n_cat].set(codes + self.offsets[None, :])

        vmem_limit = int(min(max(self._vmem_bytes(tb) * 2, 8 << 20), 64 << 20))
        grid = (b_pad // tb,)

        out = pl.pallas_call(
            _embed_kernel,
            out_shape=jax.ShapeDtypeStruct((b_pad, self.P_pad), jnp.float32),
            grid_spec=pltpu.PrefetchScalarGridSpec(
                num_scalar_prefetch=0,
                grid=grid,
                in_specs=[
                    pl.BlockSpec((tb, self.n_in_pad), lambda i: (i, 0)),
                    pl.BlockSpec((tb, self.n_cat_pad), lambda i: (i, 0)),
                    # Weights / selector: constant index_map -> VMEM-resident.
                    pl.BlockSpec((self.n_cat_pad, self.Kc_pad), lambda i: (0, 0)),
                    pl.BlockSpec((self.K_pad, self.P_pad), lambda i: (0, 0)),
                ],
                out_specs=pl.BlockSpec((tb, self.P_pad), lambda i: (i, 0)),
                scratch_shapes=[pltpu.VMEM((tb, self.K_pad), jnp.float32)],
            ),
            compiler_params=pltpu.CompilerParams(
                dimension_semantics=("parallel",),
                vmem_limit_bytes=vmem_limit,
            ),
        )(x_in, x_cat, self.selector, self.w_all)

        return out[:B, : self.post_embed_dim]

    def reference(self, x):
        """Pure-JAX reference mirroring the PyTorch forward loop."""
        if self.skip_embedding:
            return x
        cols = []
        c = 0
        for feat in range(self.input_dim):
            if self.continuous_idx[feat]:
                cols.append(x[:, feat:feat + 1].astype(jnp.float32))
            else:
                cols.append(self.emb_tables[c][x[:, feat].astype(jnp.int32)])
                c += 1
        return jnp.concatenate(cols, axis=1)


if __name__ == "__main__":
    key = jax.random.PRNGKey(0)
    k_param, k_cont, k_cat = jax.random.split(key, 3)

    # Small, forward-consistent shapes.
    batch = 32
    input_dim = 8
    cat_idxs = [1, 4, 6]
    cat_dims = [5, 7, 3]
    cat_emb_dims = [4, 3, 2]
    group_matrix = np.eye(3, input_dim, dtype=np.float32)  # 3 groups

    mod = TabularDataEmbeddingGeneratorPallas(
        input_dim, cat_dims, cat_idxs, cat_emb_dims, group_matrix, k_param
    )

    # Mixed-typed input like the torch module expects: continuous values are
    # floats, categorical columns hold integer codes stored as floats.
    x = jax.random.normal(k_cont, (batch, input_dim), dtype=jnp.float32)
    codes = jax.random.randint(
        k_cat, (batch, len(cat_idxs)), 0, np.asarray(cat_dims)[None, :]
    ).astype(jnp.float32)
    x = x.at[:, np.asarray(cat_idxs)].set(codes)

    out = jax.block_until_ready(mod(x))
    ref = mod.reference(x)
    assert out.shape == (batch, mod.post_embed_dim)
    np.testing.assert_allclose(np.asarray(out), np.asarray(ref), rtol=1e-5, atol=1e-5)
    print("KERNEL_OK")
</pallas_src>

<mosaic_0001>
module attributes {stable_mosaic.version = 11 : i64} {
  func.func @_embed_kernel(%arg0: i32, %arg1: memref<32x128xf32, #tpu.memory_space<vmem>>, %arg2: memref<32x8xi32, #tpu.memory_space<vmem>>, %arg3: memref<8x128xf32, #tpu.memory_space<vmem>>, %arg4: memref<256x128xf32, #tpu.memory_space<vmem>>, %arg5: memref<32x128xf32, #tpu.memory_space<vmem>>, %arg6: memref<32x256xf32, #tpu.memory_space<vmem>>) attributes {dimension_semantics = [#tpu.dimension_semantics<parallel>], iteration_bounds = array<i64: 1>, scalar_prefetch = 0 : i64, scratch_operands = 1 : i64, tpu.core_type = #tpu.core_type<tc>, window_params = [{transform_indices = @transform_0, window_bounds = array<i64: 32, 128>}, {transform_indices = @transform_1, window_bounds = array<i64: 32, 8>}, {pipeline_mode = #tpu.pipeline_mode<synchronous>, transform_indices = @transform_2, window_bounds = array<i64: 8, 128>}, {pipeline_mode = #tpu.pipeline_mode<synchronous>, transform_indices = @transform_3, window_bounds = array<i64: 256, 128>}, {transform_indices = @transform_4, window_bounds = array<i64: 32, 128>}]} {
    %c0 = arith.constant 0 : index
    %c0_0 = arith.constant 0 : index
    %0 = vector.load %arg2[%c0, %c0_0] : memref<32x8xi32, #tpu.memory_space<vmem>>, vector<32x8xi32>
    %1 = arith.sitofp %0 : vector<32x8xi32> to vector<32x8xf32>
    %c0_1 = arith.constant 0 : index
    %c0_2 = arith.constant 0 : index
    %2 = vector.load %arg3[%c0_1, %c0_2] : memref<8x128xf32, #tpu.memory_space<vmem>>, vector<8x128xf32>
    %cst = arith.constant dense<0.000000e+00> : vector<32x128xf32>
    %3 = tpu.matmul %1, %2, %cst {dimension_numbers = #tpu.dot_dimension_numbers<[1], [0], [0], [1], [0, 0, 1, 1], [], []>} : vector<32x8xf32>, vector<8x128xf32>, vector<32x128xf32> -> vector<32x128xf32>
    %4 = tpu.iota {dimensions = array<i32: 1>} : vector<32x128xi32>
    %5 = arith.fptosi %3 : vector<32x128xf32> to vector<32x128xi32>
    %6 = arith.cmpi eq, %4, %5 : vector<32x128xi32>
    %7 = arith.extui %6 : vector<32x128xi1> to vector<32x128xi32>
    %8 = arith.sitofp %7 : vector<32x128xi32> to vector<32x128xf32>
    %c0_3 = arith.constant 0 : index
    %c0_4 = arith.constant 0 : index
    %9 = vector.load %arg1[%c0_3, %c0_4] : memref<32x128xf32, #tpu.memory_space<vmem>>, vector<32x128xf32>
    %c0_5 = arith.constant 0 : index
    %c0_6 = arith.constant 0 : index
    %10 = vector.load %arg6[%c0_5, %c0_6] : memref<32x256xf32, #tpu.memory_space<vmem>>, vector<32x128xf32>
    tpu.vector_store %arg6[%c0_5, %c0_6], %9 {strides = array<i32>} : memref<32x256xf32, #tpu.memory_space<vmem>>, vector<32x128xf32>,
    %c0_7 = arith.constant 0 : index
    %c128 = arith.constant 128 : index
    %11 = vector.load %arg6[%c0_7, %c128] : memref<32x256xf32, #tpu.memory_space<vmem>>, vector<32x128xf32>
    tpu.vector_store %arg6[%c0_7, %c128], %8 {strides = array<i32>} : memref<32x256xf32, #tpu.memory_space<vmem>>, vector<32x128xf32>,
    %c0_8 = arith.constant 0 : index
    %c0_9 = arith.constant 0 : index
    %12 = vector.load %arg6[%c0_8, %c0_9] : memref<32x256xf32, #tpu.memory_space<vmem>>, vector<32x256xf32>
    %c0_10 = arith.constant 0 : index
    %c0_11 = arith.constant 0 : index
    %13 = vector.load %arg4[%c0_10, %c0_11] : memref<256x128xf32, #tpu.memory_space<vmem>>, vector<256x128xf32>
    %cst_12 = arith.constant dense<0.000000e+00> : vector<32x128xf32>
    %14 = tpu.matmul %12, %13, %cst_12 {dimension_numbers = #tpu.dot_dimension_numbers<[1], [0], [0], [1], [0, 0, 1, 1], [], []>} : vector<32x256xf32>, vector<256x128xf32>, vector<32x128xf32> -> vector<32x128xf32>
    %c0_13 = arith.constant 0 : index
    %c0_14 = arith.constant 0 : index
    %15 = vector.load %arg5[%c0_13, %c0_14] : memref<32x128xf32, #tpu.memory_space<vmem>>, vector<32x128xf32>
    tpu.vector_store %arg5[%c0_13, %c0_14], %14 {strides = array<i32>} : memref<32x128xf32, #tpu.memory_space<vmem>>, vector<32x128xf32>,
    return
  }
  func.func @transform_0(%arg0: i32) -> (i32, i32) {
    %c0_i32 = arith.constant 0 : i32
    %c0_i32_0 = arith.constant 0 : i32
    return %arg0, %c0_i32 : i32, i32
  }
  func.func @transform_1(%arg0: i32) -> (i32, i32) {
    %c0_i32 = arith.constant 0 : i32
    %c0_i32_0 = arith.constant 0 : i32
    return %arg0, %c0_i32 : i32, i32
  }
  func.func @transform_2(%arg0: i32) -> (i32, i32) {
    %c0_i32 = arith.constant 0 : i32
    %c0_i32_0 = arith.constant 0 : i32
    %c0_i32_1 = arith.constant 0 : i32
    return %c0_i32, %c0_i32_0 : i32, i32
  }
  func.func @transform_3(%arg0: i32) -> (i32, i32) {
    %c0_i32 = arith.constant 0 : i32
    %c0_i32_0 = arith.constant 0 : i32
    %c0_i32_1 = arith.constant 0 : i32
    return %c0_i32, %c0_i32_0 : i32, i32
  }
  func.func @transform_4(%arg0: i32) -> (i32, i32) {
    %c0_i32 = arith.constant 0 : i32
    %c0_i32_0 = arith.constant 0 : i32
    return %arg0, %c0_i32 : i32, i32
  }
}

</mosaic_0001>

<llo_original>
// kernel: tpu_custom_call.1
$region0: #{tpu_custom_call.1}
  #allocation0 [shape = 'u32[]', space=smem, size = 0x4, offset = 0x4, fixed_abs, tag = 'smem constant byte address 0x4 - core index']
  #allocation1 [shape = 'u32[144,128]{1,0:T(1,128)}', space=vmem, size = 0x12000, scoped, tag = 'internal scratch']
  #allocation2 [shape = 'f32[32,256]{1,0:T(8,128)}', space=vmem, size = 0x8000, scoped, tag = 'scratch operand']
  %s0 = inlined_call_operand.vmem [shape: f32[32,128], index: 0, kind: input, shape index: {}]
  %s1 = inlined_call_operand.vmem [shape: s32[32,8], index: 1, kind: input, shape index: {}]
  %s2 = inlined_call_operand.vmem [shape: f32[8,128], index: 2, kind: input, shape index: {}]
  %s3 = inlined_call_operand.hbm [shape: f32[256,128], index: 3, kind: input, shape index: {}]
  %s4 = inlined_call_operand.hbm [shape: f32[32,128], index: 4, kind: output, shape index: {}]
  %s5 = sld [smem:[#allocation0]]
  $region30: #{tpu_custom_call.1} parent=0
    _
  %s7 = ssub.s32 1, %s5
  %s8 = scalar_select 0, %s7, %s5
  $region1: #{tpu_custom_call.1} parent=0
    #allocation3 [shape = 'u8[131072]{0}', space=vmem, size = 0x20000, scoped, tag = 'input window, operand 3, single buffered']
    #allocation4 [shape = 's32[1]{0}', space=sflag, size = 0x4, scoped, tag = 'scoped memory for tpu_custom_call.1']
    #allocation5 [shape = 's32[1]{0}', space=sflag, size = 0x4, scoped, tag = 'scoped memory for tpu_custom_call.1']
    #allocation6 [shape = 'u8[16384]{0}', space=vmem, size = 0x4000, scoped, tag = 'output window, operand 0, single buffered']
    %9 = vsyncpa [#allocation4], 0
    %10 = vsyncpa [#allocation5], 0
    // Predicated region
    $region2: #{tpu_custom_call.1} parent=1 // pred_check
      _
    $region3: #{tpu_custom_call.1} parent=1 // pred_check_branch
      %12 = sbr.rel (0) target = $region5
    $region4: #{tpu_custom_call.1} parent=1 // pred_region
      _
    $region5: #{tpu_custom_call.1} parent=1 // pred_fallthru
      _
    // Predicated region
    $region6: #{tpu_custom_call.1} parent=1 // pred_check
      _
    $region7: #{tpu_custom_call.1} parent=1 // pred_check_branch
      %14 = sbr.rel (0) target = $region9
    $region8: #{tpu_custom_call.1} parent=1 // pred_region
      _
    $region9: #{tpu_custom_call.1} parent=1 // pred_fallthru
      _
    // Predicated region
    $region10: #{tpu_custom_call.1} parent=1 // pred_check
      _
    $region11: #{tpu_custom_call.1} parent=1 // pred_check_branch
      %16 = sbr.rel (0) target = $region13
    $region12: #{tpu_custom_call.1} parent=1 // pred_region
      _
    $region13: #{tpu_custom_call.1} parent=1 // pred_fallthru
      _
    // Predicated region
    $region14: #{tpu_custom_call.1} parent=1 // pred_check
      _
    $region15: #{tpu_custom_call.1} parent=1 // pred_check_branch
      %18 = sbr.rel (0) target = $region17
    $region16: #{tpu_custom_call.1} parent=1 // pred_region
      %s20 = ssub.s32 4096, 4096
      %21 = vsyncadd [#allocation4], %s20
      %s22 = sshll.u32 [#allocation3], 4
      %s23 = int_to_ptr.vmem [resolvable:$true] %s22
      %28 = dma.hbm_to_vmem [thread:$0]  %s3, 4096, %s23, [#allocation4], 128, 128, 8
    $region17: #{tpu_custom_call.1} parent=1 // pred_fallthru
      _
    // Predicated region
    $region18: #{tpu_custom_call.1} parent=1 // pred_check
      _
    $region19: #{tpu_custom_call.1} parent=1 // pred_check_branch
      %30 = sbr.rel (0) target = $region21
    $region20: #{tpu_custom_call.1} parent=1 // pred_region
      %31 = dma.done [#allocation4], 4096
    $region21: #{tpu_custom_call.1} parent=1 // pred_fallthru
      _
    %v32 = vld [vmem:[%s1] sm:$0xff]
    %v33 = vld [vmem:[%s1 + $0x8] sm:$0xff]
    %v34 = vld [vmem:[%s1 + $0x10] sm:$0xff]
    %v35 = vld [vmem:[%s1 + $0x18] sm:$0xff]
    %v36 = vcvt.s32.f32 %v32
    %v37 = vcvt.s32.f32 %v33
    %v38 = vcvt.s32.f32 %v34
    %v39 = vcvt.s32.f32 %v35
    %v40 = vld [vmem:[%s2] sm:$0xff]
    %vm41 = vcmask 64512
    %v43 = vsel %vm41, %v36, 0
    %v46 = vsel %vm41, %v37, 0
    %v49 = vsel %vm41, %v38, 0
    %v52 = vsel %vm41, %v39, 0
    %54 = vmatprep.subr.mxu0 0.0
    %55 = vmatpush1.msra.mxu0 %v40
    %56 = vmatprep.subr.mxu0 0.0
    %57 = vmatpush1.msra.mxu0 0.0
    %58 = vmatprep.subr.mxu0 0.0
    %59 = vmatpush1.msra.mxu0 0.0
    %60 = vmatprep.subr.mxu0 0.0
    %61 = vmatpush1.msra.mxu0 0.0
    %62 = vmatprep.subr.mxu0 0.0
    %63 = vmatpush1.msra.mxu0 0.0
    %64 = vmatprep.subr.mxu0 0.0
    %65 = vmatpush1.msra.mxu0 0.0
    %66 = vmatprep.subr.mxu0 0.0
    %67 = vmatpush1.msra.mxu0 0.0
    %68 = vmatprep.subr.mxu0 0.0
    %69 = vmatpush1.msra.mxu0 0.0
    %70 = vmatprep.subr.mxu0 0.0
    %71 = vmatpush1.msra.mxu0 0.0
    %72 = vmatprep.subr.mxu0 0.0
    %73 = vmatpush1.msra.mxu0 0.0
    %74 = vmatprep.subr.mxu0 0.0
    %75 = vmatpush1.msra.mxu0 0.0
    %76 = vmatprep.subr.mxu0 0.0
    %77 = vmatpush1.msra.mxu0 0.0
    %78 = vmatprep.subr.mxu0 0.0
    %79 = vmatpush1.msra.mxu0 0.0
    %80 = vmatprep.subr.mxu0 0.0
    %81 = vmatpush1.msra.mxu0 0.0
    %82 = vmatprep.subr.mxu0 0.0
    %83 = vmatpush1.msra.mxu0 0.0
    %84 = vmatprep.subr.mxu0 0.0
    %85 = vmatpush1.msra.mxu0 0.0
    %86 = vmatprep.subr.mxu0 0.0
    %87 = vmatpush1.msra.mxu0 0.0
    %88 = vmatprep.subr.mxu0 0.0
    %89 = vmatpush1.msra.mxu0 0.0
    %90 = vmatprep.subr.mxu0 0.0
    %91 = vmatpush1.msra.mxu0 0.0
    %92 = vmatprep.subr.mxu0 0.0
    %93 = vmatpush1.msra.mxu0 0.0
    %94 = vmatprep.subr.mxu0 0.0
    %95 = vmatpush1.msra.mxu0 0.0
    %96 = vmatprep.subr.mxu0 0.0
    %97 = vmatpush1.msra.mxu0 0.0
    %98 = vmatprep.subr.mxu0 0.0
    %99 = vmatpush1.msra.mxu0 0.0
    %100 = vmatprep.subr.mxu0 0.0
    %101 = vmatpush1.msra.mxu0 0.0
    %102 = vmatprep.subr.mxu0 0.0
    %103 = vmatpush1.msra.mxu0 0.0
    %104 = vmatprep.subr.mxu0 0.0
    %105 = vmatpush1.msra.mxu0 0.0
    %106 = vmatprep.subr.mxu0 0.0
    %107 = vmatpush1.msra.mxu0 0.0
    %108 = vmatprep.subr.mxu0 0.0
    %109 = vmatpush1.msra.mxu0 0.0
    %110 = vmatprep.subr.mxu0 0.0
    %111 = vmatpush1.msra.mxu0 0.0
    %112 = vmatprep.subr.mxu0 0.0
    %113 = vmatpush1.msra.mxu0 0.0
    %114 = vmatprep.subr.mxu0 0.0
    %115 = vmatpush1.msra.mxu0 0.0
    %116 = vmatprep.subr.mxu0 0.0
    %117 = vmatpush1.msra.mxu0 0.0
    %118 = vmatprep.mubr.f32.mxu0 0.0
    %119 = vmatmul.mubr.f32.gmra.mrb[0].mxu0 %v43
    %v120 = vpop.f32.mrb[0].mxu0
    %v121 = vadd.f32 0.0, %v120
    %v122 = vpop.f32.mrb[0].mxu0
    %123 = vmatprep.mubr.f32.mxu0 0.0
    %124 = vmatmul.mubr.f32.gmra.mrb[0].mxu0 %v46
    %v125 = vpop.f32.mrb[0].mxu0
    %v126 = vadd.f32 0.0, %v125
    %v127 = vpop.f32.mrb[0].mxu0
    %128 = vmatprep.mubr.f32.mxu0 0.0
    %129 = vmatmul.mubr.f32.gmra.mrb[0].mxu0 %v49
    %v130 = vpop.f32.mrb[0].mxu0
    %v131 = vadd.f32 0.0, %v130
    %v132 = vpop.f32.mrb[0].mxu0
    %133 = vmatprep.mubr.f32.mxu0 0.0
    %134 = vmatmul.mubr.f32.gmra.mrb[0].mxu0 %v52
    %v135 = vpop.f32.mrb[0].mxu0
    %v136 = vadd.f32 0.0, %v135
    %v137 = vpop.f32.mrb[0].mxu0
    %138 = vdwg.mxu0
    %v139 = vlaneseq
    %v140 = vand.u32 %v139, 127
    %v141 = vcvt.f32.s32.to.zero.pseudo %v121
    %v142 = vcvt.f32.s32.to.zero.pseudo %v126
    %v143 = vcvt.f32.s32.to.zero.pseudo %v131
    %v144 = vcvt.f32.s32.to.zero.pseudo %v136
    %vm145 = vcmp.eq.s32.totalorder %v140, %v141
    %vm146 = vcmp.eq.s32.totalorder %v140, %v142
    %vm147 = vcmp.eq.s32.totalorder %v140, %v143
    %vm148 = vcmp.eq.s32.totalorder %v140, %v144
    %v149 = vsel %vm145, 1, 0
    %v150 = vsel %vm146, 1, 0
    %v151 = vsel %vm147, 1, 0
    %v152 = vsel %vm148, 1, 0
    %v153 = vcvt.s32.f32 %v149
    %v154 = vcvt.s32.f32 %v150
    %v155 = vcvt.s32.f32 %v151
    %v156 = vcvt.s32.f32 %v152
    %v157 = vld [vmem:[%s0] sm:$0xff]
    %v158 = vld [vmem:[%s0 + $0x8] sm:$0xff]
    %v159 = vld [vmem:[%s0 + $0x10] sm:$0xff]
    %v160 = vld [vmem:[%s0 + $0x18] sm:$0xff]
    %161 = vst [vmem:[#allocation2] sm:$0xff] %v157
    %162 = vst [vmem:[#allocation2 + $0x10] sm:$0xff] %v158
    %163 = vst [vmem:[#allocation2 + $0x20] sm:$0xff] %v159
    %164 = vst [vmem:[#allocation2 + $0x30] sm:$0xff] %v160
    %165 = vst [vmem:[#allocation2 + $0x8] sm:$0xff] %v153
    %166 = vst [vmem:[#allocation2 + $0x18] sm:$0xff] %v154
    %167 = vst [vmem:[#allocation2 + $0x28] sm:$0xff] %v155
    %168 = vst [vmem:[#allocation2 + $0x38] sm:$0xff] %v156
    %v169 = vld [vmem:[#allocation2] sm:$0xff]
    %v170 = vld [vmem:[#allocation2 + $0x8] sm:$0xff]
    %v171 = vld [vmem:[#allocation2 + $0x10] sm:$0xff]
    %v172 = vld [vmem:[#allocation2 + $0x18] sm:$0xff]
    %v173 = vld [vmem:[#allocation2 + $0x20] sm:$0xff]
    %v174 = vld [vmem:[#allocation2 + $0x28] sm:$0xff]
    %v175 = vld [vmem:[#allocation2 + $0x30] sm:$0xff]
    %v176 = vld [vmem:[#allocation2 + $0x38] sm:$0xff]
    %v177 = vld [vmem:[#allocation3] sm:$0xff]
    %v178 = vld [vmem:[#allocation3 + $0x8] sm:$0xff]
    %v179 = vld [vmem:[#allocation3 + $0x10] sm:$0xff]
    %v180 = vld [vmem:[#allocation3 + $0x18] sm:$0xff]
    %v181 = vld [vmem:[#allocation3 + $0x20] sm:$0xff]
    %v182 = vld [vmem:[#allocation3 + $0x28] sm:$0xff]
    %v183 = vld [vmem:[#allocation3 + $0x30] sm:$0xff]
    %v184 = vld [vmem:[#allocation3 + $0x38] sm:$0xff]
    %v185 = vld [vmem:[#allocation3 + $0x40] sm:$0xff]
    %v186 = vld [vmem:[#allocation3 + $0x48] sm:$0xff]
    %v187 = vld [vmem:[#allocation3 + $0x50] sm:$0xff]
    %v188 = vld [vmem:[#allocation3 + $0x58] sm:$0xff]
    %v189 = vld [vmem:[#allocation3 + $0x60] sm:$0xff]
    %v190 = vld [vmem:[#allocation3 + $0x68] sm:$0xff]
    %v191 = vld [vmem:[#allocation3 + $0x70] sm:$0xff]
    %v192 = vld [vmem:[#allocation3 + $0x78] sm:$0xff]
    %v193 = vld [vmem:[#allocation3 + $0x80] sm:$0xff]
    %v194 = vld [vmem:[#allocation3 + $0x88] sm:$0xff]
    %v195 = vld [vmem:[#allocation3 + $0x90] sm:$0xff]
    %v196 = vld [vmem:[#allocation3 + $0x98] sm:$0xff]
    %v197 = vld [vmem:[#allocation3 + $0xa0] sm:$0xff]
    %v198 = vld [vmem:[#allocation3 + $0xa8] sm:$0xff]
    %v199 = vld [vmem:[#allocation3 + $0xb0] sm:$0xff]
    %v200 = vld [vmem:[#allocation3 + $0xb8] sm:$0xff]
    %v201 = vld [vmem:[#allocation3 + $0xc0] sm:$0xff]
    %v202 = vld [vmem:[#allocation3 + $0xc8] sm:$0xff]
    %v203 = vld [vmem:[#allocation3 + $0xd0] sm:$0xff]
    %v204 = vld [vmem:[#allocation3 + $0xd8] sm:$0xff]
    %v205 = vld [vmem:[#allocation3 + $0xe0] sm:$0xff]
    %v206 = vld [vmem:[#allocation3 + $0xe8] sm:$0xff]
    %v207 = vld [vmem:[#allocation3 + $0xf0] sm:$0xff]
    %v208 = vld [vmem:[#allocation3 + $0xf8] sm:$0xff]
    %209 = vmatprep.subr.mxu0 0.0
    %210 = vmatpush1.msra.mxu0 %v177
    %211 = vmatprep.subr.mxu0 0.0
    %212 = vmatpush1.msra.mxu0 %v178
    %213 = vmatprep.subr.mxu0 0.0
    %214 = vmatpush1.msra.mxu0 %v179
    %215 = vmatprep.subr.mxu0 0.0
    %216 = vmatpush1.msra.mxu0 %v180
    %217 = vmatprep.subr.mxu0 0.0
    %218 = vmatpush1.msra.mxu0 %v181
    %219 = vmatprep.subr.mxu0 0.0
    %220 = vmatpush1.msra.mxu0 %v182
    %221 = vmatprep.subr.mxu0 0.0
    %222 = vmatpush1.msra.mxu0 %v183
    %223 = vmatprep.subr.mxu0 0.0
    %224 = vmatpush1.msra.mxu0 %v184
    %225 = vmatprep.subr.mxu0 0.0
    %226 = vmatpush1.msra.mxu0 %v185
    %227 = vmatprep.subr.mxu0 0.0
    %228 = vmatpush1.msra.mxu0 %v186
    %229 = vmatprep.subr.mxu0 0.0
    %230 = vmatpush1.msra.mxu0 %v187
    %231 = vmatprep.subr.mxu0 0.0
    %232 = vmatpush1.msra.mxu0 %v188
    %233 = vmatprep.subr.mxu0 0.0
    %234 = vmatpush1.msra.mxu0 %v189
    %235 = vmatprep.subr.mxu0 0.0
    %236 = vmatpush1.msra.mxu0 %v190
    %237 = vmatprep.subr.mxu0 0.0
    %238 = vmatpush1.msra.mxu0 %v191
    %239 = vmatprep.subr.mxu0 0.0
    %240 = vmatpush1.msra.mxu0 %v192
    %241 = vmatprep.subr.mxu0 0.0
    %242 = vmatpush1.msra.mxu0 %v193
    %243 = vmatprep.subr.mxu0 0.0
    %244 = vmatpush1.msra.mxu0 %v194
    %245 = vmatprep.subr.mxu0 0.0
    %246 = vmatpush1.msra.mxu0 %v195
    %247 = vmatprep.subr.mxu0 0.0
    %248 = vmatpush1.msra.mxu0 %v196
    %249 = vmatprep.subr.mxu0 0.0
    %250 = vmatpush1.msra.mxu0 %v197
    %251 = vmatprep.subr.mxu0 0.0
    %252 = vmatpush1.msra.mxu0 %v198
    %253 = vmatprep.subr.mxu0 0.0
    %254 = vmatpush1.msra.mxu0 %v199
    %255 = vmatprep.subr.mxu0 0.0
    %256 = vmatpush1.msra.mxu0 %v200
    %257 = vmatprep.subr.mxu0 0.0
    %258 = vmatpush1.msra.mxu0 %v201
    %259 = vmatprep.subr.mxu0 0.0
    %260 = vmatpush1.msra.mxu0 %v202
    %261 = vmatprep.subr.mxu0 0.0
    %262 = vmatpush1.msra.mxu0 %v203
    %263 = vmatprep.subr.mxu0 0.0
    %264 = vmatpush1.msra.mxu0 %v204
    %265 = vmatprep.subr.mxu0 0.0
    %266 = vmatpush1.msra.mxu0 %v205
    %267 = vmatprep.subr.mxu0 0.0
    %268 = vmatpush1.msra.mxu0 %v206
    %269 = vmatprep.subr.mxu0 0.0
    %270 = vmatpush1.msra.mxu0 %v207
    %271 = vmatprep.subr.mxu0 0.0
    %272 = vmatpush1.msra.mxu0 %v208
    %273 = vmatprep.mubr.f32.mxu0 %v170
    %274 = vmatmul.mubr.f32.gmra.mrb[0].mxu0 %v169
    %v275 = vpop.f32.mrb[0].mxu0
    %v276 = vadd.f32 0.0, %v275
    %v277 = vpop.f32.mrb[0].mxu0
    %278 = vmatprep.mubr.f32.mxu0 %v172
    %279 = vmatmul.mubr.f32.gmra.mrb[0].mxu0 %v171
    %v280 = vpop.f32.mrb[0].mxu0
    %v281 = vadd.f32 0.0, %v280
    %v282 = vpop.f32.mrb[0].mxu0
    %283 = vmatprep.mubr.f32.mxu0 %v174
    %284 = vmatmul.mubr.f32.gmra.mrb[0].mxu0 %v173
    %v285 = vpop.f32.mrb[0].mxu0
    %v286 = vadd.f32 0.0, %v285
    %v287 = vpop.f32.mrb[0].mxu0
    %288 = vmatprep.mubr.f32.mxu0 %v176
    %289 = vmatmul.mubr.f32.gmra.mrb[0].mxu0 %v175
    %v290 = vpop.f32.mrb[0].mxu0
    %v291 = vadd.f32 0.0, %v290
    %v292 = vpop.f32.mrb[0].mxu0
    %293 = vdwg.mxu0
    %294 = vst [vmem:[#allocation6] sm:$0xff] %v276
    %295 = vst [vmem:[#allocation6 + $0x8] sm:$0xff] %v281
    %296 = vst [vmem:[#allocation6 + $0x10] sm:$0xff] %v286
    %297 = vst [vmem:[#allocation6 + $0x18] sm:$0xff] %v291
    // Predicated region
    $region22: #{tpu_custom_call.1} parent=1 // pred_check
      _
    $region23: #{tpu_custom_call.1} parent=1 // pred_check_branch
      %299 = sbr.rel (0) target = $region25
    $region24: #{tpu_custom_call.1} parent=1 // pred_region
      %s301 = ssub.s32 512, 512
      %302 = vsyncadd [#allocation5], %s301
      %s303 = sshll.u32 [#allocation6], 4
      %s304 = int_to_ptr.vmem [resolvable:$true] %s303
      %309 = dma.vmem_to_hbm [thread:$0]  %s304, 512, %s4, [#allocation5], 128, 128, 8
    $region25: #{tpu_custom_call.1} parent=1 // pred_fallthru
      _
    // Predicated region
    $region26: #{tpu_custom_call.1} parent=1 // pred_check
      _
    $region27: #{tpu_custom_call.1} parent=1 // pred_check_branch
      %311 = sbr.rel (0) target = $region29
    $region28: #{tpu_custom_call.1} parent=1 // pred_region
      %312 = dma.done [#allocation5], 512
    $region29: #{tpu_custom_call.1} parent=1 // pred_fallthru
      _
    %313 = vsyncpa [#allocation4], 1
    %314 = vsyncpa [#allocation5], 1

</llo_original>
